<compile_context>
chip_gen: v7x
topology: tpu7x:2x2x1
jax: 0.10.0
libtpu: 0.0.40
codegen_flags: <defaults>
</compile_context>

<pallas_src>
import functools

import jax
import jax.numpy as jnp
from jax import lax
from jax.experimental import pallas as pl
from jax.experimental.pallas import tpu as pltpu


def _row_tile(rows, target=512):
    """Largest row tile <= target that divides `rows` (multiples of 8 preferred)."""
    if rows <= target:
        return rows
    t = (target // 8) * 8
    while t >= 8:
        if rows % t == 0:
            return t
        t -= 8
    return rows  # fallback: whole array as one block


def _joint_loss_kernel(rep_ref, xr_ref, xo_ref, out_ref, acc_ref, *,
                       batch_size, tau, use_cosine, use_mse,
                       use_contrastive, use_distance, recon_elems):
    pid = pl.program_id(0)
    nsteps = pl.num_programs(0)

    @pl.when(pid == 0)
    def _():
        acc_ref[...] = jnp.zeros_like(acc_ref)

    # ---- reconstruction loss: per-tile, per-lane partial sums (f32 acc) ----
    xr = xr_ref[...].astype(jnp.float32)
    xo = xo_ref[...].astype(jnp.float32)
    if use_mse:
        d = xr - xo
        elem = d * d
    else:
        # F.binary_cross_entropy semantics (log clamped at -100 like PyTorch)
        log_p = jnp.maximum(jnp.log(xr), -100.0)
        log_1mp = jnp.maximum(jnp.log(1.0 - xr), -100.0)
        elem = -(xo * log_p + (1.0 - xo) * log_1mp)
    # Sublane-reduce only per step; cross-lane reduce deferred to the end.
    acc_ref[...] += jnp.sum(elem, axis=0, keepdims=True)            # (1, feat)

    # ---- final step: contrastive + distance losses, pack the 4 scalars ----
    @pl.when(pid == nsteps - 1)
    def _():
        recon = jnp.sum(acc_ref[...], keepdims=True) * (1.0 / float(recon_elems))

        rep = rep_ref[...]
        N = batch_size
        zi = rep[:N, :].astype(jnp.float32)
        zj = rep[N:, :].astype(jnp.float32)

        if use_contrastive:
            if use_cosine:
                # 1/max(||x||, 1e-12) via rsqrt of the clamped squared norm (EUP).
                inv_i = lax.rsqrt(jnp.maximum(
                    jnp.sum(zi * zi, axis=-1, keepdims=True), 1e-24))
                inv_j = lax.rsqrt(jnp.maximum(
                    jnp.sum(zj * zj, axis=-1, keepdims=True), 1e-24))
                xi = zi * inv_i
                xj = zj * inv_j
            else:
                xi, xj = zi, zj
            # (N, N) similarity, contracting the feature axis (no transpose).
            # Operands stay in the representation's native dtype; f32 MXU acc.
            # TODO(synk): for very large batch_size, flash-tile the (N,N) logits
            # over a key-axis grid with an online logsumexp to bound VMEM.
            sim = lax.dot_general(
                xi.astype(rep_ref.dtype), xj.astype(rep_ref.dtype),
                (((1,), (1,)), ((), ())),
                preferred_element_type=jnp.float32)
            logits = sim * (1.0 / float(tau))
            # nn.CrossEntropyLoss(reduction='mean') with all labels == 0.
            m = jnp.max(logits, axis=-1, keepdims=True)
            lse = jnp.log(jnp.sum(jnp.exp(logits - m), axis=-1, keepdims=True)) + m
            per_row = lse - logits[:, 0:1]                          # (N, 1)
            closs = jnp.sum(per_row, keepdims=True) * (1.0 / float(N))
        else:
            closs = jnp.zeros((1, 1), jnp.float32)

        if use_distance:
            zd = zi - zj
            zrecon = jnp.sum(zd * zd, keepdims=True) * (
                1.0 / float(zi.shape[0] * zi.shape[1]))
        else:
            zrecon = jnp.zeros((1, 1), jnp.float32)

        total = recon + closs + zrecon

        # Pack [total, closs, recon, zrecon] into one lane-dense (1, 128) vector.
        lanes = lax.broadcasted_iota(jnp.int32, (1, 128), 1)
        out_ref[...] = jnp.where(
            lanes == 0, total,
            jnp.where(lanes == 1, closs,
                      jnp.where(lanes == 2, recon,
                                jnp.where(lanes == 3, zrecon, 0.0))))


def joint_loss(representation, xrecon, xorig, options, row_tile=None):
    """Returns (total_loss, closs, recon_loss, zrecon_loss) as f32 scalars."""
    two_n, rep_dim = representation.shape
    rows, feat = xrecon.shape
    assert xorig.shape == xrecon.shape
    batch_size = int(options['batch_size'])

    tile = int(row_tile) if row_tile is not None else _row_tile(rows)
    assert rows % tile == 0, (rows, tile)
    grid = (rows // tile,)

    kernel = functools.partial(
        _joint_loss_kernel,
        batch_size=batch_size,
        tau=float(options['tau']),
        use_cosine=bool(options['cosine_similarity']),
        use_mse=bool(options['reconstruction']),
        use_contrastive=bool(options['contrastive_loss']),
        use_distance=bool(options['distance_loss']),
        recon_elems=rows * feat)

    n = batch_size
    flops = 2 * n * n * rep_dim + 6 * rows * feat + 8 * n * rep_dim
    transcendentals = n * n + 2 * n + (
        0 if options['reconstruction'] else 2 * rows * feat)
    bytes_accessed = (representation.size * representation.dtype.itemsize
                      + xrecon.size * xrecon.dtype.itemsize
                      + xorig.size * xorig.dtype.itemsize + 512)

    out = pl.pallas_call(
        kernel,
        out_shape=jax.ShapeDtypeStruct((1, 128), jnp.float32),
        grid=grid,
        in_specs=[
            pl.BlockSpec((two_n, rep_dim), lambda i: (0, 0)),   # full rep, resident
            pl.BlockSpec((tile, feat), lambda i: (i, 0)),       # xrecon row tiles
            pl.BlockSpec((tile, feat), lambda i: (i, 0)),       # xorig  row tiles
        ],
        out_specs=pl.BlockSpec((1, 128), lambda i: (0, 0)),
        scratch_shapes=[pltpu.VMEM((1, feat), jnp.float32)],
        compiler_params=pltpu.CompilerParams(
            dimension_semantics=("arbitrary",)),
        cost_estimate=pl.CostEstimate(
            flops=flops, transcendentals=transcendentals,
            bytes_accessed=bytes_accessed),
    )(representation, xrecon, xorig)

    return (out[0, 0], out[0, 1], out[0, 2], out[0, 3])


# ---------------- pure-JAX reference (mirrors the PyTorch module) -----------
def joint_loss_ref(representation, xrecon, xorig, options):
    rep = representation.astype(jnp.float32)
    xr = xrecon.astype(jnp.float32)
    xo = xorig.astype(jnp.float32)
    N = int(options['batch_size'])

    if options['reconstruction']:
        recon = jnp.mean((xr - xo) ** 2)
    else:
        recon = jnp.mean(-(xo * jnp.maximum(jnp.log(xr), -100.0)
                           + (1.0 - xo) * jnp.maximum(jnp.log(1.0 - xr), -100.0)))

    zi, zj = rep[:N], rep[N:]
    if options['contrastive_loss']:
        if options['cosine_similarity']:
            xi = zi / jnp.maximum(jnp.linalg.norm(zi, axis=-1, keepdims=True), 1e-12)
            xj = zj / jnp.maximum(jnp.linalg.norm(zj, axis=-1, keepdims=True), 1e-12)
        else:
            xi, xj = zi, zj
        logits = (xi @ xj.T) / float(options['tau'])
        lse = jax.scipy.special.logsumexp(logits, axis=-1)
        closs = jnp.mean(lse - logits[:, 0])
    else:
        closs = jnp.float32(0.0)

    zrecon = jnp.mean((zi - zj) ** 2) if options['distance_loss'] else jnp.float32(0.0)
    total = recon + closs + zrecon
    return (total, closs, recon, zrecon)


def _check(got, want, tag):
    for g, w in zip(got, want):
        assert jnp.allclose(g, w, rtol=1e-3, atol=1e-3), (tag, g, w)


if __name__ == "__main__":
    options = {
        'batch_size': 8,
        'tau': 0.1,
        'device': 'tpu',
        'cosine_similarity': True,
        'reconstruction': True,      # MSE recon loss
        'contrastive_loss': True,
        'distance_loss': True,
    }

    key = jax.random.PRNGKey(0)
    k1, k2, k3 = jax.random.split(key, 3)
    two_n, rep_dim, feat_dim = 2 * options['batch_size'], 32, 64

    representation = jax.random.normal(k1, (two_n, rep_dim), dtype=jnp.float32)
    xorig = jax.random.uniform(k2, (two_n, feat_dim), dtype=jnp.float32,
                               minval=0.05, maxval=0.95)
    xrecon = jnp.clip(
        xorig + 0.1 * jax.random.normal(k3, (two_n, feat_dim), dtype=jnp.float32),
        0.01, 0.99)

    # --- config A: MSE recon + cosine contrastive, single tile (grid = 1) ---
    ref = joint_loss_ref(representation, xrecon, xorig, options)
    out = jax.block_until_ready(joint_loss(representation, xrecon, xorig, options))
    _check(out, ref, "mse/cosine grid1")

    # --- config A, multi-tile path exercising the gridded accumulator ------
    out2 = jax.block_until_ready(
        joint_loss(representation, xrecon, xorig, options, row_tile=8))
    _check(out2, ref, "mse/cosine grid2")

    # --- config B: BCE recon + dot-product similarity ----------------------
    options_b = dict(options, reconstruction=False, cosine_similarity=False)
    ref_b = joint_loss_ref(representation, xrecon, xorig, options_b)
    out_b = jax.block_until_ready(
        joint_loss(representation, xrecon, xorig, options_b))
    _check(out_b, ref_b, "bce/dot grid1")

    print("KERNEL_OK")
</pallas_src>

<mosaic_0001>
module attributes {stable_mosaic.version = 11 : i64} {
  func.func @_joint_loss_kernel(%arg0: i32, %arg1: memref<16x32xf32, #tpu.memory_space<vmem>>, %arg2: memref<16x64xf32, #tpu.memory_space<vmem>>, %arg3: memref<16x64xf32, #tpu.memory_space<vmem>>, %arg4: memref<1x128xf32, #tpu.memory_space<vmem>>, %arg5: memref<1x64xf32, #tpu.memory_space<vmem>>) attributes {dimension_semantics = [#tpu.dimension_semantics<arbitrary>], iteration_bounds = array<i64: 1>, scalar_prefetch = 0 : i64, scratch_operands = 1 : i64, tpu.core_type = #tpu.core_type<tc>, window_params = [{pipeline_mode = #tpu.pipeline_mode<synchronous>, transform_indices = @transform_0, window_bounds = array<i64: 16, 32>}, {transform_indices = @transform_1, window_bounds = array<i64: 16, 64>}, {transform_indices = @transform_2, window_bounds = array<i64: 16, 64>}, {pipeline_mode = #tpu.pipeline_mode<synchronous>, transform_indices = @transform_3, window_bounds = array<i64: 1, 128>}]} {
    %c0_i32 = arith.constant 0 : i32
    %0 = arith.cmpi eq, %arg0, %c0_i32 : i32
    %1 = arith.extui %0 : i1 to i32
    %c0_i32_0 = arith.constant 0 : i32
    %2 = arith.cmpi ne, %1, %c0_i32_0 : i32
    scf.if %2 {
      %cst_10 = arith.constant 0.000000e+00 : f32
      %15 = vector.broadcast %cst_10 : f32 to vector<1x64xf32>
      %c0_11 = arith.constant 0 : index
      %c0_12 = arith.constant 0 : index
      %16 = vector.load %arg5[%c0_11, %c0_12] : memref<1x64xf32, #tpu.memory_space<vmem>>, vector<1x64xf32>
      tpu.vector_store %arg5[%c0_11, %c0_12], %15 {strides = array<i32>} : memref<1x64xf32, #tpu.memory_space<vmem>>, vector<1x64xf32>,
    } else {
    }
    %c0 = arith.constant 0 : index
    %c0_1 = arith.constant 0 : index
    %3 = vector.load %arg2[%c0, %c0_1] : memref<16x64xf32, #tpu.memory_space<vmem>>, vector<16x64xf32>
    %c0_2 = arith.constant 0 : index
    %c0_3 = arith.constant 0 : index
    %4 = vector.load %arg3[%c0_2, %c0_3] : memref<16x64xf32, #tpu.memory_space<vmem>>, vector<16x64xf32>
    %5 = arith.subf %3, %4 : vector<16x64xf32>
    %6 = arith.mulf %5, %5 : vector<16x64xf32>
    %c0_4 = arith.constant 0 : index
    %c0_5 = arith.constant 0 : index
    %7 = vector.load %arg5[%c0_4, %c0_5] : memref<1x64xf32, #tpu.memory_space<vmem>>, vector<1x64xf32>
    %cst = arith.constant dense<0.000000e+00> : vector<64xf32>
    %8 = vector.multi_reduction <add>, %6, %cst [0] : vector<16x64xf32> to vector<64xf32>
    %9 = vector.shape_cast %8 : vector<64xf32> to vector<1x64xf32>
    %10 = arith.addf %7, %9 : vector<1x64xf32>
    %c0_6 = arith.constant 0 : index
    %c0_7 = arith.constant 0 : index
    %11 = vector.load %arg5[%c0_6, %c0_7] : memref<1x64xf32, #tpu.memory_space<vmem>>, vector<1x64xf32>
    tpu.vector_store %arg5[%c0_6, %c0_7], %10 {strides = array<i32>} : memref<1x64xf32, #tpu.memory_space<vmem>>, vector<1x64xf32>,
    %c0_i32_8 = arith.constant 0 : i32
    %12 = arith.cmpi eq, %arg0, %c0_i32_8 : i32
    %13 = arith.extui %12 : i1 to i32
    %c0_i32_9 = arith.constant 0 : i32
    %14 = arith.cmpi ne, %13, %c0_i32_9 : i32
    scf.if %14 {
      %c0_10 = arith.constant 0 : index
      %c0_11 = arith.constant 0 : index
      %15 = vector.load %arg5[%c0_10, %c0_11] : memref<1x64xf32, #tpu.memory_space<vmem>>, vector<1x64xf32>
      %16 = vector.shape_cast %15 : vector<1x64xf32> to vector<1x1x64xf32>
      %cst_12 = arith.constant dense<0.000000e+00> : vector<1xf32>
      %17 = vector.multi_reduction <add>, %16, %cst_12 [1, 2] : vector<1x1x64xf32> to vector<1xf32>
      %18 = vector.shape_cast %17 : vector<1xf32> to vector<1x1x1xf32>
      %19 = vector.extract %18[0, 0, 0] : f32 from vector<1x1x1xf32>
      %20 = vector.broadcast %19 : f32 to vector<1x1xf32>
      %cst_13 = arith.constant 9.765625E-4 : f32
      %21 = vector.broadcast %cst_13 : f32 to vector<1x1xf32>
      %22 = arith.mulf %20, %21 : vector<1x1xf32>
      %c0_14 = arith.constant 0 : index
      %c0_15 = arith.constant 0 : index
      %23 = vector.load %arg1[%c0_14, %c0_15] : memref<16x32xf32, #tpu.memory_space<vmem>>, vector<16x32xf32>
      %24 = vector.extract_strided_slice %23 {offsets = [0, 0], sizes = [8, 32], strides = [1, 1]} : vector<16x32xf32> to vector<8x32xf32>
      %25 = vector.extract_strided_slice %23 {offsets = [8, 0], sizes = [8, 32], strides = [1, 1]} : vector<16x32xf32> to vector<8x32xf32>
      %26 = arith.mulf %24, %24 : vector<8x32xf32>
      %cst_16 = arith.constant dense<0.000000e+00> : vector<8xf32>
      %27 = vector.multi_reduction <add>, %26, %cst_16 [1] : vector<8x32xf32> to vector<8xf32>
      %28 = vector.shape_cast %27 : vector<8xf32> to vector<8x1xf32>
      %cst_17 = arith.constant 1.000000e-24 : f32
      %29 = vector.broadcast %cst_17 : f32 to vector<8x1xf32>
      %30 = arith.maximumf %28, %29 : vector<8x1xf32>
      %31 = math.rsqrt %30 : vector<8x1xf32>
      %32 = arith.mulf %25, %25 : vector<8x32xf32>
      %cst_18 = arith.constant dense<0.000000e+00> : vector<8xf32>
      %33 = vector.multi_reduction <add>, %32, %cst_18 [1] : vector<8x32xf32> to vector<8xf32>
      %34 = vector.shape_cast %33 : vector<8xf32> to vector<8x1xf32>
      %cst_19 = arith.constant 1.000000e-24 : f32
      %35 = vector.broadcast %cst_19 : f32 to vector<8x1xf32>
      %36 = arith.maximumf %34, %35 : vector<8x1xf32>
      %37 = math.rsqrt %36 : vector<8x1xf32>
      %38 = vector.broadcast %31 : vector<8x1xf32> to vector<8x32xf32>
      %39 = arith.mulf %24, %38 : vector<8x32xf32>
      %40 = vector.broadcast %37 : vector<8x1xf32> to vector<8x32xf32>
      %41 = arith.mulf %25, %40 : vector<8x32xf32>
      %cst_20 = arith.constant dense<0.000000e+00> : vector<8x8xf32>
      %42 = tpu.matmul %39, %41, %cst_20 {dimension_numbers = #tpu.dot_dimension_numbers<[1], [1], [0], [0], [0, 0, 1, 0], [], []>} : vector<8x32xf32>, vector<8x32xf32>, vector<8x8xf32> -> vector<8x8xf32>
      %cst_21 = arith.constant 1.000000e+01 : f32
      %43 = vector.broadcast %cst_21 : f32 to vector<8x8xf32>
      %44 = arith.mulf %42, %43 : vector<8x8xf32>
      %cst_22 = arith.constant dense<0xFF800000> : vector<8xf32>
      %45 = vector.multi_reduction <maximumf>, %44, %cst_22 [1] : vector<8x8xf32> to vector<8xf32>
      %46 = vector.shape_cast %45 : vector<8xf32> to vector<8x1xf32>
      %47 = vector.broadcast %46 : vector<8x1xf32> to vector<8x8xf32>
      %48 = arith.subf %44, %47 : vector<8x8xf32>
      %49 = math.exp %48 : vector<8x8xf32>
      %cst_23 = arith.constant dense<0.000000e+00> : vector<8xf32>
      %50 = vector.multi_reduction <add>, %49, %cst_23 [1] : vector<8x8xf32> to vector<8xf32>
      %51 = vector.shape_cast %50 : vector<8xf32> to vector<8x1xf32>
      %52 = math.log %51 : vector<8x1xf32>
      %53 = arith.addf %52, %46 : vector<8x1xf32>
      %54 = vector.extract_strided_slice %44 {offsets = [0, 0], sizes = [8, 1], strides = [1, 1]} : vector<8x8xf32> to vector<8x1xf32>
      %55 = arith.subf %53, %54 : vector<8x1xf32>
      %56 = vector.shape_cast %55 : vector<8x1xf32> to vector<1x8x1xf32>
      %cst_24 = arith.constant dense<0.000000e+00> : vector<1xf32>
      %57 = vector.multi_reduction <add>, %56, %cst_24 [1, 2] : vector<1x8x1xf32> to vector<1xf32>
      %58 = vector.shape_cast %57 : vector<1xf32> to vector<1x1x1xf32>
      %59 = vector.extract %58[0, 0, 0] : f32 from vector<1x1x1xf32>
      %60 = vector.broadcast %59 : f32 to vector<1x1xf32>
      %cst_25 = arith.constant 1.250000e-01 : f32
      %61 = vector.broadcast %cst_25 : f32 to vector<1x1xf32>
      %62 = arith.mulf %60, %61 : vector<1x1xf32>
      %63 = arith.subf %24, %25 : vector<8x32xf32>
      %64 = arith.mulf %63, %63 : vector<8x32xf32>
      %65 = vector.shape_cast %64 : vector<8x32xf32> to vector<1x8x32xf32>
      %cst_26 = arith.constant dense<0.000000e+00> : vector<1xf32>
      %66 = vector.multi_reduction <add>, %65, %cst_26 [1, 2] : vector<1x8x32xf32> to vector<1xf32>
      %67 = vector.shape_cast %66 : vector<1xf32> to vector<1x1x1xf32>
      %68 = vector.extract %67[0, 0, 0] : f32 from vector<1x1x1xf32>
      %69 = vector.broadcast %68 : f32 to vector<1x1xf32>
      %cst_27 = arith.constant 3.906250e-03 : f32
      %70 = vector.broadcast %cst_27 : f32 to vector<1x1xf32>
      %71 = arith.mulf %69, %70 : vector<1x1xf32>
      %72 = arith.addf %22, %62 : vector<1x1xf32>
      %73 = arith.addf %72, %71 : vector<1x1xf32>
      %74 = tpu.iota {dimensions = array<i32: 1>} : vector<1x128xi32>
      %c0_i32_28 = arith.constant 0 : i32
      %75 = vector.broadcast %c0_i32_28 : i32 to vector<1x128xi32>
      %76 = arith.cmpi eq, %74, %75 : vector<1x128xi32>
      %c1_i32 = arith.constant 1 : i32
      %77 = vector.broadcast %c1_i32 : i32 to vector<1x128xi32>
      %78 = arith.cmpi eq, %74, %77 : vector<1x128xi32>
      %c2_i32 = arith.constant 2 : i32
      %79 = vector.broadcast %c2_i32 : i32 to vector<1x128xi32>
      %80 = arith.cmpi eq, %74, %79 : vector<1x128xi32>
      %c3_i32 = arith.constant 3 : i32
      %81 = vector.broadcast %c3_i32 : i32 to vector<1x128xi32>
      %82 = arith.cmpi eq, %74, %81 : vector<1x128xi32>
      %cst_29 = arith.constant 0.000000e+00 : f32
      %83 = vector.shape_cast %71 : vector<1x1xf32> to vector<1x1xf32>
      %84 = vector.broadcast %83 : vector<1x1xf32> to vector<1x128xf32>
      %85 = vector.broadcast %cst_29 : f32 to vector<1x128xf32>
      %86 = arith.select %82, %84, %85 : vector<1x128xi1>, vector<1x128xf32>
      %87 = vector.shape_cast %22 : vector<1x1xf32> to vector<1x1xf32>
      %88 = vector.broadcast %87 : vector<1x1xf32> to vector<1x128xf32>
      %89 = arith.select %80, %88, %86 : vector<1x128xi1>, vector<1x128xf32>
      %90 = vector.shape_cast %62 : vector<1x1xf32> to vector<1x1xf32>
      %91 = vector.broadcast %90 : vector<1x1xf32> to vector<1x128xf32>
      %92 = arith.select %78, %91, %89 : vector<1x128xi1>, vector<1x128xf32>
      %93 = vector.shape_cast %73 : vector<1x1xf32> to vector<1x1xf32>
      %94 = vector.broadcast %93 : vector<1x1xf32> to vector<1x128xf32>
      %95 = arith.select %76, %94, %92 : vector<1x128xi1>, vector<1x128xf32>
      %c0_30 = arith.constant 0 : index
      %c0_31 = arith.constant 0 : index
      %96 = vector.load %arg4[%c0_30, %c0_31] : memref<1x128xf32, #tpu.memory_space<vmem>>, vector<1x128xf32>
      tpu.vector_store %arg4[%c0_30, %c0_31], %95 {strides = array<i32>} : memref<1x128xf32, #tpu.memory_space<vmem>>, vector<1x128xf32>,
    } else {
    }
    return
  }
  func.func @transform_0(%arg0: i32) -> (i32, i32) {
    %c0_i32 = arith.constant 0 : i32
    %c0_i32_0 = arith.constant 0 : i32
    %c0_i32_1 = arith.constant 0 : i32
    return %c0_i32, %c0_i32_0 : i32, i32
  }
  func.func @transform_1(%arg0: i32) -> (i32, i32) {
    %c0_i32 = arith.constant 0 : i32
    %c0_i32_0 = arith.constant 0 : i32
    return %arg0, %c0_i32 : i32, i32
  }
  func.func @transform_2(%arg0: i32) -> (i32, i32) {
    %c0_i32 = arith.constant 0 : i32
    %c0_i32_0 = arith.constant 0 : i32
    return %arg0, %c0_i32 : i32, i32
  }
  func.func @transform_3(%arg0: i32) -> (i32, i32) {
    %c0_i32 = arith.constant 0 : i32
    %c0_i32_0 = arith.constant 0 : i32
    %c0_i32_1 = arith.constant 0 : i32
    return %c0_i32, %c0_i32_0 : i32, i32
  }
}

</mosaic_0001>

<llo_original>
// kernel: tpu_custom_call.1
$region0: #{tpu_custom_call.1}
  #allocation0 [shape = 'u32[]', space=smem, size = 0x4, offset = 0x4, fixed_abs, tag = 'smem constant byte address 0x4 - core index']
  #allocation1 [shape = 'u32[144,128]{1,0:T(1,128)}', space=vmem, size = 0x12000, scoped, tag = 'internal scratch']
  #allocation2 [shape = 'f32[1,64]{1,0:T(1,128)}', space=vmem, size = 0x200, scoped, tag = 'scratch operand']
  %s0 = inlined_call_operand.hbm [shape: f32[16,32], index: 0, kind: input, shape index: {}]
  %s1 = inlined_call_operand.hbm [shape: f32[16,64], index: 1, kind: input, shape index: {}]
  %s2 = inlined_call_operand.hbm [shape: f32[16,64], index: 2, kind: input, shape index: {}]
  %s3 = inlined_call_operand.hbm [shape: f32[1,128], index: 3, kind: output, shape index: {}]
  %s4 = sld [smem:[#allocation0]]
  $region42: #{tpu_custom_call.1} parent=0
    _
  %s6 = ssub.s32 1, %s4
  %s7 = scalar_select 0, %s6, %s4
  $region1: #{tpu_custom_call.1} parent=0
    #allocation3 [shape = 'u8[8192]{0}', space=vmem, size = 0x2000, scoped, tag = 'input window, operand 0, single buffered']
    #allocation4 [shape = 's32[1]{0}', space=sflag, size = 0x4, scoped, tag = 'scoped memory for tpu_custom_call.1']
    #allocation5 [shape = 's32[1]{0}', space=sflag, size = 0x4, scoped, tag = 'scoped memory for tpu_custom_call.1']
    #allocation6 [shape = 'u8[8192]{0}', space=vmem, size = 0x2000, scoped, tag = 'input window, operand 1, single buffered']
    #allocation7 [shape = 's32[1]{0}', space=sflag, size = 0x4, scoped, tag = 'scoped memory for tpu_custom_call.1']
    #allocation8 [shape = 'u8[8192]{0}', space=vmem, size = 0x2000, scoped, tag = 'input window, operand 2, single buffered']
    #allocation9 [shape = 'u8[512]{0}', space=vmem, size = 0x400, scoped, tag = 'output window, operand 0, single buffered']
    %8 = vsyncpa [#allocation4], 0
    %9 = vsyncpa [#allocation7], 0
    %10 = vsyncpa [#allocation5], 0
    // Predicated region
    $region2: #{tpu_custom_call.1} parent=1 // pred_check
      _
    $region3: #{tpu_custom_call.1} parent=1 // pred_check_branch
      %12 = sbr.rel (0) target = $region5
    $region4: #{tpu_custom_call.1} parent=1 // pred_region
      %s14 = ssub.s32 256, 256
      %15 = vsyncadd [#allocation4], %s14
      %s16 = sshll.u32 [#allocation3], 4
      %s17 = int_to_ptr.vmem [resolvable:$true] %s16
      %22 = dma.hbm_to_vmem [thread:$0]  %s0, 256, %s17, [#allocation4], 128, 128, 8
    $region5: #{tpu_custom_call.1} parent=1 // pred_fallthru
      _
    // Predicated region
    $region6: #{tpu_custom_call.1} parent=1 // pred_check
      _
    $region7: #{tpu_custom_call.1} parent=1 // pred_check_branch
      %24 = sbr.rel (0) target = $region9
    $region8: #{tpu_custom_call.1} parent=1 // pred_region
      %s26 = ssub.s32 256, 256
      %27 = vsyncadd [#allocation7], %s26
      %s28 = sshll.u32 [#allocation6], 4
      %s29 = int_to_ptr.vmem [resolvable:$true] %s28
      %34 = dma.hbm_to_vmem [thread:$0]  %s1, 256, %s29, [#allocation7], 128, 128, 8
    $region9: #{tpu_custom_call.1} parent=1 // pred_fallthru
      _
    // Predicated region
    $region10: #{tpu_custom_call.1} parent=1 // pred_check
      _
    $region11: #{tpu_custom_call.1} parent=1 // pred_check_branch
      %36 = sbr.rel (0) target = $region13
    $region12: #{tpu_custom_call.1} parent=1 // pred_region
      %s38 = ssub.s32 256, 256
      %39 = vsyncadd [#allocation7], %s38
      %s40 = sshll.u32 [#allocation8], 4
      %s41 = int_to_ptr.vmem [resolvable:$true] %s40
      %46 = dma.hbm_to_vmem [thread:$0]  %s2, 256, %s41, [#allocation7], 128, 128, 8
    $region13: #{tpu_custom_call.1} parent=1 // pred_fallthru
      _
    // Predicated region
    $region14: #{tpu_custom_call.1} parent=1 // pred_check
      _
    $region15: #{tpu_custom_call.1} parent=1 // pred_check_branch
      %48 = sbr.rel (0) target = $region17
    $region16: #{tpu_custom_call.1} parent=1 // pred_region
      %49 = dma.done [#allocation4], 256
    $region17: #{tpu_custom_call.1} parent=1 // pred_fallthru
      _
    // Predicated region
    $region18: #{tpu_custom_call.1} parent=1 // pred_check
      _
    $region19: #{tpu_custom_call.1} parent=1 // pred_check_branch
      %51 = sbr.rel (0) target = $region21
    $region20: #{tpu_custom_call.1} parent=1 // pred_region
      %52 = dma.done [#allocation7], 256
    $region21: #{tpu_custom_call.1} parent=1 // pred_fallthru
      _
    // Predicated region
    $region22: #{tpu_custom_call.1} parent=1 // pred_check
      _
    $region23: #{tpu_custom_call.1} parent=1 // pred_check_branch
      %54 = sbr.rel (0) target = $region25
    $region24: #{tpu_custom_call.1} parent=1 // pred_region
      %55 = dma.done [#allocation7], 256
    $region25: #{tpu_custom_call.1} parent=1 // pred_fallthru
      _
    %p56 = scmp.eq.s32.totalorder 0, 0
    // Predicated region
    $region26: #{tpu_custom_call.1} parent=1 // pred_check
      %p57 = pneg %p56
    $region27: #{tpu_custom_call.1} parent=1 // pred_check_branch
      %59 = sbr.rel (%p57) target = $region29
    $region28: #{tpu_custom_call.1} parent=1 // pred_region
      %vm60 = vcmask 516096
      %61 = vst.msk [vmem:[#allocation2] sm:$0x1] %vm60, 0.0
    $region29: #{tpu_custom_call.1} parent=1 // pred_fallthru
      _
    %v62 = vld [vmem:[#allocation6] sm:$0xff]
    %v63 = vld [vmem:[#allocation6 + $0x8] sm:$0xff]
    %v64 = vld [vmem:[#allocation8] sm:$0xff]
    %v65 = vld [vmem:[#allocation8 + $0x8] sm:$0xff]
    %v66 = vsub.f32 %v62, %v64
    %v67 = vsub.f32 %v63, %v65
    %v68 = vmul.f32 %v66, %v66
    %v69 = vmul.f32 %v67, %v67
    %v70 = vld [vmem:[#allocation2] sm:$0x1]
    %vm71 = vcmask 523264
    %v72 = vsel %vm71, %v68, 0.0
    %v73 = vsel %vm71, %v69, 0.0
    %v74 = vadd.f32 %v72, %v73
    %v75 = vrot.slane %v74, 4
    %v76 = vadd.f32 %v74, %v75
    %v77 = vrot.slane %v76, 2
    %v78 = vadd.f32 %v76, %v77
    %v79 = vrot.slane %v78, 1
    %v80 = vadd.f32 %v78, %v79
    %v81 = vadd.f32 %v70, %v80
    %vm82 = vcmask 516096
    %83 = vst.msk [vmem:[#allocation2] sm:$0x1] %vm82, %v81
    // Predicated region
    $region30: #{tpu_custom_call.1} parent=1 // pred_check
      %p84 = pneg %p56
    $region31: #{tpu_custom_call.1} parent=1 // pred_check_branch
      %86 = sbr.rel (%p84) target = $region33
    $region32: #{tpu_custom_call.1} parent=1 // pred_region
      %v87 = vld [vmem:[#allocation2] sm:$0x1]
      %v88 = vsel %vm82, %v87, 0.0
      %89 = vadd.xlane.f32.xlu0 %v88
      %v90 = vpop.xlane.xlu0 %89
      %v91 = vrot.slane %v90, 4
      %v92 = vadd.f32 %v90, %v91
      %v93 = vrot.slane %v92, 2
      %v94 = vadd.f32 %v92, %v93
      %v95 = vrot.slane %v94, 1
      %v96 = vadd.f32 %v94, %v95
      %s97 = vtos %v96
      %v98 = vstv %s97
      %v99 = vmul.f32 %v98, 0.0009765625
      %v100 = vld [vmem:[#allocation3] sm:$0xff]
      %v101 = vld [vmem:[#allocation3 + $0x8] sm:$0xff]
      %v102 = vmul.f32 %v100, %v100
      %vm103 = vcmask 261120
      %v104 = vsel %vm103, %v102, 0.0
      %105 = vadd.xlane.f32.xlu0 %v104
      %v106 = vpop.xlane.xlu0 %105
      %v107 = vmax.f32 %v106, 1e-24
      %v108 = vrsqrt.pop %v107
      %v109 = vmul.f32 %v101, %v101
      %v110 = vsel %vm103, %v109, 0.0
      %111 = vadd.xlane.f32.xlu0 %v110
      %v112 = vpop.xlane.xlu0 %111
      %v113 = vmax.f32 %v112, 1e-24
      %v114 = vrsqrt.pop %v113
      %v115 = vmul.f32 %v100, %v108
      %v116 = vmul.f32 %v101, %v114
      %v118 = vsel %vm103, %v115, 0
      %v121 = vsel %vm103, %v116, 0
      %123 = vmatprep.subr.mxu0 0.0
      %124 = vmatpush1.xpose.msra.mxu0 %v121
      %125 = vmatprep.subr.mxu0 0.0
      %126 = vmatpush1.xpose.msra.mxu0 0.0
      %127 = vmatprep.subr.mxu0 0.0
      %128 = vmatpush1.xpose.msra.mxu0 0.0
      %129 = vmatprep.subr.mxu0 0.0
      %130 = vmatpush1.xpose.msra.mxu0 0.0
      %131 = vmatprep.subr.mxu0 0.0
      %132 = vmatpush1.xpose.msra.mxu0 0.0
      %133 = vmatprep.subr.mxu0 0.0
      %134 = vmatpush1.xpose.msra.mxu0 0.0
      %135 = vmatprep.subr.mxu0 0.0
      %136 = vmatpush1.xpose.msra.mxu0 0.0
      %137 = vmatprep.subr.mxu0 0.0
      %138 = vmatpush1.xpose.msra.mxu0 0.0
      %139 = vmatprep.subr.mxu0 0.0
      %140 = vmatpush1.xpose.msra.mxu0 0.0
      %141 = vmatprep.subr.mxu0 0.0
      %142 = vmatpush1.xpose.msra.mxu0 0.0
      %143 = vmatprep.subr.mxu0 0.0
      %144 = vmatpush1.xpose.msra.mxu0 0.0
      %145 = vmatprep.subr.mxu0 0.0
      %146 = vmatpush1.xpose.msra.mxu0 0.0
      %147 = vmatprep.subr.mxu0 0.0
      %148 = vmatpush1.xpose.msra.mxu0 0.0
      %149 = vmatprep.subr.mxu0 0.0
      %150 = vmatpush1.xpose.msra.mxu0 0.0
      %151 = vmatprep.subr.mxu0 0.0
      %152 = vmatpush1.xpose.msra.mxu0 0.0
      %153 = vmatprep.subr.mxu0 0.0
      %154 = vmatpush1.xpose.msra.mxu0 0.0
      %155 = vmatprep.subr.mxu0 0.0
      %156 = vmatpush1.xpose.msra.mxu0 0.0
      %157 = vmatprep.subr.mxu0 0.0
      %158 = vmatpush1.xpose.msra.mxu0 0.0
      %159 = vmatprep.subr.mxu0 0.0
      %160 = vmatpush1.xpose.msra.mxu0 0.0
      %161 = vmatprep.subr.mxu0 0.0
      %162 = vmatpush1.xpose.msra.mxu0 0.0
      %163 = vmatprep.subr.mxu0 0.0
      %164 = vmatpush1.xpose.msra.mxu0 0.0
      %165 = vmatprep.subr.mxu0 0.0
      %166 = vmatpush1.xpose.msra.mxu0 0.0
      %167 = vmatprep.subr.mxu0 0.0
      %168 = vmatpush1.xpose.msra.mxu0 0.0
      %169 = vmatprep.subr.mxu0 0.0
      %170 = vmatpush1.xpose.msra.mxu0 0.0
      %171 = vmatprep.subr.mxu0 0.0
      %172 = vmatpush1.xpose.msra.mxu0 0.0
      %173 = vmatprep.subr.mxu0 0.0
      %174 = vmatpush1.xpose.msra.mxu0 0.0
      %175 = vmatprep.subr.mxu0 0.0
      %176 = vmatpush1.xpose.msra.mxu0 0.0
      %177 = vmatprep.subr.mxu0 0.0
      %178 = vmatpush1.xpose.msra.mxu0 0.0
      %179 = vmatprep.subr.mxu0 0.0
      %180 = vmatpush1.xpose.msra.mxu0 0.0
      %181 = vmatprep.subr.mxu0 0.0
      %182 = vmatpush1.xpose.msra.mxu0 0.0
      %183 = vmatprep.subr.mxu0 0.0
      %184 = vmatpush1.xpose.msra.mxu0 0.0
      %185 = vmatprep.subr.mxu0 0.0
      %186 = vmatpush1.xpose.msra.mxu0 0.0
      %187 = vmatprep.mubr.f32.mxu0 0.0
      %188 = vmatmul.mubr.f32.gmra.mrb[0].mxu0 %v118
      %v189 = vpop.f32.mrb[0].mxu0
      %v190 = vadd.f32 0.0, %v189
      %v191 = vpop.f32.mrb[0].mxu0
      %192 = vdwg.mxu0
      %v193 = vmul.f32 %v190, 10.0
      %vm194 = vcmask 64512
      %v195 = vsel %vm194, %v193, -inf
      %196 = vmax.xlane.f32.xlu0 %v195
      %v197 = vpop.xlane.xlu0 %196
      %v198 = vsub.f32 %v193, %v197
      %v199 = vmul.f32 %v198, 1.442695
      %v200 = vpow.pop %v199
      %v201 = vsel %vm194, %v200, 0.0
      %202 = vadd.xlane.f32.xlu0 %v201
      %v203 = vpop.xlane.xlu0 %202
      %v204 = vlog2.pop %v203
      %v205 = vmul.f32 %v204, 0.6931472
      %v206 = vadd.f32 %v205, %v197
      %v207 = vsub.f32 %v206, %v193
      %vm208 = vcmask 7168
      %v209 = vsel %vm208, %v207, 0.0
      %210 = vadd.xlane.f32.xlu0 %v209
      %v211 = vpop.xlane.xlu0 %210
      %v212 = vrot.slane %v211, 4
      %v213 = vadd.f32 %v211, %v212
      %v214 = vrot.slane %v213, 2
      %v215 = vadd.f32 %v213, %v214
      %v216 = vrot.slane %v215, 1
      %v217 = vadd.f32 %v215, %v216
      %s218 = vtos %v217
      %v219 = vstv %s218
      %v220 = vmul.f32 %v219, 0.125
      %v221 = vsub.f32 %v100, %v101
      %v222 = vmul.f32 %v221, %v221
      %v223 = vsel %vm103, %v222, 0.0
      %224 = vadd.xlane.f32.xlu0 %v223
      %v225 = vpop.xlane.xlu0 %224
      %v226 = vrot.slane %v225, 4
      %v227 = vadd.f32 %v225, %v226
      %v228 = vrot.slane %v227, 2
      %v229 = vadd.f32 %v227, %v228
      %v230 = vrot.slane %v229, 1
      %v231 = vadd.f32 %v229, %v230
      %s232 = vtos %v231
      %v233 = vstv %s232
      %v234 = vmul.f32 %v233, 0.00390625
      %v235 = vadd.f32 %v99, %v220
      %v236 = vadd.f32 %v235, %v234
      %v237 = vlaneseq
      %v238 = vand.u32 %v237, 127
      %vm239 = vcmp.eq.s32.totalorder %v238, 0
      %vm240 = vcmp.eq.s32.totalorder %v238, 1
      %vm241 = vcmp.eq.s32.totalorder %v238, 2
      %vm242 = vcmp.eq.s32.totalorder %v238, 3
      %v243 = vsel %vm242, %v234, 0.0
      %v244 = vsel %vm241, %v99, %v243
      %v245 = vsel %vm240, %v220, %v244
      %v246 = vsel %vm239, %v236, %v245
      %247 = vst [vmem:[#allocation9] sm:$0x1] %v246
    $region33: #{tpu_custom_call.1} parent=1 // pred_fallthru
      _
    // Predicated region
    $region34: #{tpu_custom_call.1} parent=1 // pred_check
      _
    $region35: #{tpu_custom_call.1} parent=1 // pred_check_branch
      %249 = sbr.rel (0) target = $region37
    $region36: #{tpu_custom_call.1} parent=1 // pred_region
      %s251 = ssub.s32 16, 16
      %252 = vsyncadd [#allocation5], %s251
      %s254 = sshll.u32 [#allocation9], 4
      %s255 = int_to_ptr.vmem [resolvable:$true] %s254
      %257 = dma.vmem_to_hbm [thread:$0]  %s255, 16, %s3, [#allocation5]
    $region37: #{tpu_custom_call.1} parent=1 // pred_fallthru
      _
    // Predicated region
    $region38: #{tpu_custom_call.1} parent=1 // pred_check
      _
    $region39: #{tpu_custom_call.1} parent=1 // pred_check_branch
      %259 = sbr.rel (0) target = $region41
    $region40: #{tpu_custom_call.1} parent=1 // pred_region
      %260 = dma.done [#allocation5], 16
    $region41: #{tpu_custom_call.1} parent=1 // pred_fallthru
      _
    %261 = vsyncpa [#allocation4], 1
    %262 = vsyncpa [#allocation7], 1
    %263 = vsyncpa [#allocation5], 1

</llo_original>
